<compile_context>
chip_gen: v7x
topology: tpu7x:2x2x1
jax: 0.10.0
libtpu: 0.0.40
codegen_flags: <defaults>
</compile_context>

<pallas_src>
import functools

import jax
import jax.numpy as jnp
from jax.experimental import pallas as pl
from jax.experimental.pallas import tpu as pltpu

_LANES = 128
_ACC_ROWS = 64      # 8 independent (8,128) f32 vreg partials per core
_ROW_ALIGN = 64     # tile_rows % 64 == 0: satisfies int8 (32,128) packed-tile
                    # constraint and divides evenly into the (64,128) accumulator


def _round_up(x, m):
    return ((x + m - 1) // m) * m


def _bce_kernel(x_ref, y_ref, o_ref, *, tile_rows, tiles_per_core, n_valid):
    """One (tile_rows, 128) tile of stable BCE-with-logits, accumulated.

    x_ref: (tile_rows, 128) logits, native dtype     (VMEM)
    y_ref: (tile_rows, 128) labels, int8 / float     (VMEM)
    o_ref: (_ACC_ROWS, 128) f32 per-core partial sums (output block, resident
           in VMEM across the reduction axis -> doubles as the accumulator)
    """
    c = pl.program_id(0)          # TensorCore split (parallel axis)
    i = pl.program_id(1)          # reduction sweep (arbitrary axis)

    @pl.when(i == 0)
    def _():
        o_ref[...] = jnp.zeros_like(o_ref)

    # In-kernel casts (VPU); labels were DMA'd in their narrow native dtype.
    x = x_ref[...].astype(jnp.float32)
    y = y_ref[...].astype(jnp.float32)

    # Numerically-stable BCE-with-logits (same form PyTorch uses).
    per = jnp.maximum(x, 0.0) - x * y + jnp.log1p(jnp.exp(-jnp.abs(x)))

    blk = c * tiles_per_core + i          # logical (unclamped) tile index
    tile_elems = tile_rows * _LANES

    def _accumulate(vals):
        # Fold tile_rows down to _ACC_ROWS with pure VPU adds; 8 independent
        # (8,128) vreg partials keep the add dependency chain short.  The
        # single cross-lane/sublane reduce happens once, outside the kernel.
        o_ref[...] += vals.reshape(-1, _ACC_ROWS, _LANES).sum(axis=0)

    # Fast path: tile lies entirely inside the valid range -> no mask work.
    @pl.when((blk + 1) * tile_elems <= n_valid)
    def _():
        _accumulate(per)

    # Slow path (at most the last ragged tile + one clamped duplicate tile):
    # mask out host-pad elements and Pallas OOB-garbage rows.
    @pl.when((blk + 1) * tile_elems > n_valid)
    def _():
        row = jax.lax.broadcasted_iota(jnp.int32, per.shape, 0)
        lane = jax.lax.broadcasted_iota(jnp.int32, per.shape, 1)
        # int32 flat index: fine for n < 2**31 (typical SetCriterion sizes).
        flat = (blk * tile_rows + row) * _LANES + lane
        _accumulate(jnp.where(flat < n_valid, per, 0.0))


def bce_with_logits_pallas(concat, change, *, max_tile_rows=4096, num_cores=2):
    """Mean BCE-with-logits over all elements, computed with a Pallas kernel."""
    x = concat.reshape(-1)
    y = change.reshape(-1)
    n = x.shape[0]
    assert y.shape[0] == n, (concat.shape, change.shape)

    # Stream labels in the narrowest legal dtype (int8) -> 4x less label HBM
    # traffic than int32; floating labels (soft targets) keep their dtype.
    if y.dtype == jnp.bool_ or (jnp.issubdtype(y.dtype, jnp.integer)
                                and y.dtype.itemsize != 1):
        y = y.astype(jnp.int8)

    rows = pl.cdiv(n, _LANES)
    tile_rows = min(_round_up(rows, _ROW_ALIGN),
                    _round_up(max_tile_rows, _ROW_ALIGN))
    n_tiles = pl.cdiv(rows, tile_rows)
    tiles_per_core = pl.cdiv(n_tiles, num_cores)

    # Pad only to the 128-lane boundary (<=127 elements). Ragged last tiles are
    # handled in-kernel, so there is no padding to a tile_rows multiple.
    pad = rows * _LANES - n
    if pad:
        x = jnp.pad(x, (0, pad))
        y = jnp.pad(y, (0, pad))
    x2 = x.reshape(rows, _LANES)
    y2 = y.reshape(rows, _LANES)

    def in_map(c, i):
        blk = c * tiles_per_core + i
        # The trailing core may get one duplicate tile when n_tiles is odd;
        # clamp its block index (the kernel fully masks it: its logical
        # element range is >= n).
        return (jnp.minimum(blk, n_tiles - 1), 0)

    kernel = functools.partial(_bce_kernel, tile_rows=tile_rows,
                               tiles_per_core=tiles_per_core, n_valid=n)

    cost = pl.CostEstimate(
        flops=6 * n,
        transcendentals=2 * n,                       # exp + log1p per element
        bytes_accessed=int(x2.nbytes + y2.nbytes
                           + num_cores * _ACC_ROWS * _LANES * 4),
    )

    partial_sums = pl.pallas_call(
        kernel,
        out_shape=jax.ShapeDtypeStruct((num_cores * _ACC_ROWS, _LANES),
                                       jnp.float32),
        grid=(num_cores, tiles_per_core),
        in_specs=[
            pl.BlockSpec((tile_rows, _LANES), in_map),
            pl.BlockSpec((tile_rows, _LANES), in_map),
        ],
        # Output doubles as the per-core accumulator: its block index is
        # constant over the reduction axis, so it stays resident in VMEM.
        out_specs=pl.BlockSpec((_ACC_ROWS, _LANES), lambda c, i: (c, 0)),
        compiler_params=pltpu.CompilerParams(
            dimension_semantics=("parallel", "arbitrary"),
            vmem_limit_bytes=48 * 1024 * 1024,
        ),
        cost_estimate=cost,
    )(x2, y2)

    # Tiny epilogue (num_cores*64*128 f32): one reduce + true-count divide.
    return jnp.sum(partial_sums) / jnp.float32(n)


def _reference_loss(concat, change):
    """Pure-JAX reference (matches torch BCEWithLogitsLoss, reduction='mean')."""
    x = concat.astype(jnp.float32).reshape(-1)
    y = change.astype(jnp.float32).reshape(-1)
    per = jnp.maximum(x, 0.0) - x * y + jnp.log1p(jnp.exp(-jnp.abs(x)))
    return jnp.mean(per)


def set_criterion_loss(concat, change, *, min_kernel_elems=4096):
    """For tiny batches the pallas_call fixed overhead dwarfs ~40 flops/elem,
    so plain XLA fusion is used below `min_kernel_elems`."""
    if concat.size < min_kernel_elems:
        return _reference_loss(concat, change)
    return bce_with_logits_pallas(concat, change)


def set_criterion_forward(concat, sample):
    """JAX mirror of SetCriterion.forward(concat, sample)."""
    # TODO(synk): `self.losses` dict from __init__ is unused by the PyTorch
    # forward, so it has no kernel-side equivalent.
    return set_criterion_loss(concat, sample["change"])


if __name__ == "__main__":
    key = jax.random.PRNGKey(0)
    k1, k2, k3, k4, k5, k6 = jax.random.split(key, 6)

    # Case 1: small batch, single ragged tile, bool labels (-> int8 DMA path).
    B1 = 300
    concat1 = jax.random.normal(k1, (B1, 1), dtype=jnp.float32)       # logits
    change1 = jax.random.bernoulli(k2, 0.5, (B1,))                    # bool labels
    loss1 = jax.block_until_ready(bce_with_logits_pallas(concat1, change1))
    ref1 = jax.block_until_ready(_reference_loss(concat1, change1))
    assert jnp.allclose(loss1, ref1, atol=1e-5, rtol=1e-5), (loss1, ref1)

    # Case 2: multi-tile grid with an odd tile count (exercises the 2-way core
    # split, the clamped duplicate tile and the ragged-tile mask); int32 labels.
    B2 = 20000
    concat2 = jax.random.normal(k3, (B2, 1), dtype=jnp.float32)
    change2 = jax.random.bernoulli(k4, 0.5, (B2,)).astype(jnp.int32)
    loss2 = jax.block_until_ready(
        bce_with_logits_pallas(concat2, change2, max_tile_rows=64))
    ref2 = jax.block_until_ready(_reference_loss(concat2, change2))
    assert jnp.allclose(loss2, ref2, atol=1e-5, rtol=1e-5), (loss2, ref2)

    # Case 3: lane-aligned size (no host pad at all) with soft float labels.
    B3 = 640
    concat3 = jax.random.normal(k5, (B3, 1), dtype=jnp.float32)
    change3 = jax.random.uniform(k6, (B3,), dtype=jnp.float32)
    loss3 = jax.block_until_ready(bce_with_logits_pallas(concat3, change3))
    ref3 = jax.block_until_ready(_reference_loss(concat3, change3))
    assert jnp.allclose(loss3, ref3, atol=1e-5, rtol=1e-5), (loss3, ref3)

    # Case 4: module-level forward with a dict sample (tiny batch falls back
    # to the fused-XLA path).
    loss4 = jax.block_until_ready(
        set_criterion_forward(concat1, {"change": change1}))
    assert jnp.allclose(loss4, ref1, atol=1e-5, rtol=1e-5), (loss4, ref1)

    print("KERNEL_OK")
</pallas_src>

<mosaic_0001>
module attributes {stable_mosaic.version = 11 : i64} {
  func.func @_bce_kernel(%arg0: i32, %arg1: i32, %arg2: memref<64x128xf32, #tpu.memory_space<vmem>>, %arg3: memref<64x128xi8, #tpu.memory_space<vmem>>, %arg4: memref<64x128xf32, #tpu.memory_space<vmem>>) attributes {dimension_semantics = [#tpu.dimension_semantics<parallel>, #tpu.dimension_semantics<arbitrary>], iteration_bounds = array<i64: 2, 1>, scalar_prefetch = 0 : i64, scratch_operands = 0 : i64, tpu.core_type = #tpu.core_type<tc>, window_params = [{transform_indices = @transform_0, window_bounds = array<i64: 64, 128>}, {transform_indices = @transform_1, window_bounds = array<i64: 64, 128>}, {transform_indices = @transform_2, window_bounds = array<i64: 64, 128>}]} {
    %c0_i32 = arith.constant 0 : i32
    %0 = arith.cmpi eq, %arg1, %c0_i32 : i32
    %1 = arith.extui %0 : i1 to i32
    %c0_i32_0 = arith.constant 0 : i32
    %2 = arith.cmpi ne, %1, %c0_i32_0 : i32
    scf.if %2 {
      %cst_11 = arith.constant 0.000000e+00 : f32
      %28 = vector.broadcast %cst_11 : f32 to vector<64x128xf32>
      %c0_12 = arith.constant 0 : index
      %c0_13 = arith.constant 0 : index
      %29 = vector.load %arg4[%c0_12, %c0_13] : memref<64x128xf32, #tpu.memory_space<vmem>>, vector<64x128xf32>
      tpu.vector_store %arg4[%c0_12, %c0_13], %28 {strides = array<i32>} : memref<64x128xf32, #tpu.memory_space<vmem>>, vector<64x128xf32>,
    } else {
    }
    %c0 = arith.constant 0 : index
    %c0_1 = arith.constant 0 : index
    %3 = vector.load %arg2[%c0, %c0_1] : memref<64x128xf32, #tpu.memory_space<vmem>>, vector<64x128xf32>
    %c0_2 = arith.constant 0 : index
    %c0_3 = arith.constant 0 : index
    %4 = vector.load %arg3[%c0_2, %c0_3] : memref<64x128xi8, #tpu.memory_space<vmem>>, vector<64x128xi8>
    %5 = arith.sitofp %4 : vector<64x128xi8> to vector<64x128xf32>
    %cst = arith.constant 0.000000e+00 : f32
    %6 = vector.broadcast %cst : f32 to vector<64x128xf32>
    %7 = arith.maximumf %3, %6 : vector<64x128xf32>
    %8 = arith.mulf %3, %5 : vector<64x128xf32>
    %9 = arith.subf %7, %8 : vector<64x128xf32>
    %10 = math.absf %3 : vector<64x128xf32>
    %cst_4 = arith.constant 0.000000e+00 : f32
    %11 = vector.broadcast %cst_4 : f32 to vector<64x128xf32>
    %12 = arith.subf %11, %10 : vector<64x128xf32>
    %13 = math.exp %12 : vector<64x128xf32>
    %14 = math.log1p %13 : vector<64x128xf32>
    %15 = arith.addf %9, %14 : vector<64x128xf32>
    %c1_i32 = arith.constant 1 : i32
    %16 = arith.muli %arg0, %c1_i32 : i32
    %17 = arith.addi %16, %arg1 : i32
    %c1_i32_5 = arith.constant 1 : i32
    %18 = arith.addi %17, %c1_i32_5 : i32
    %c8192_i32 = arith.constant 8192 : i32
    %19 = arith.muli %18, %c8192_i32 : i32
    %c300_i32 = arith.constant 300 : i32
    %20 = arith.cmpi sle, %19, %c300_i32 : i32
    %21 = arith.extui %20 : i1 to i32
    %c0_i32_6 = arith.constant 0 : i32
    %22 = arith.cmpi ne, %21, %c0_i32_6 : i32
    scf.if %22 {
      %c0_11 = arith.constant 0 : index
      %c0_12 = arith.constant 0 : index
      %28 = vector.load %arg4[%c0_11, %c0_12] : memref<64x128xf32, #tpu.memory_space<vmem>>, vector<64x128xf32>
      %29 = vector.shape_cast %15 : vector<64x128xf32> to vector<1x64x128xf32>
      %cst_13 = arith.constant dense<0.000000e+00> : vector<64x128xf32>
      %30 = vector.multi_reduction <add>, %29, %cst_13 [0] : vector<1x64x128xf32> to vector<64x128xf32>
      %31 = arith.addf %28, %30 : vector<64x128xf32>
      %c0_14 = arith.constant 0 : index
      %c0_15 = arith.constant 0 : index
      %32 = vector.load %arg4[%c0_14, %c0_15] : memref<64x128xf32, #tpu.memory_space<vmem>>, vector<64x128xf32>
      tpu.vector_store %arg4[%c0_14, %c0_15], %31 {strides = array<i32>} : memref<64x128xf32, #tpu.memory_space<vmem>>, vector<64x128xf32>,
    } else {
    }
    %c1_i32_7 = arith.constant 1 : i32
    %23 = arith.addi %17, %c1_i32_7 : i32
    %c8192_i32_8 = arith.constant 8192 : i32
    %24 = arith.muli %23, %c8192_i32_8 : i32
    %c300_i32_9 = arith.constant 300 : i32
    %25 = arith.cmpi sgt, %24, %c300_i32_9 : i32
    %26 = arith.extui %25 : i1 to i32
    %c0_i32_10 = arith.constant 0 : i32
    %27 = arith.cmpi ne, %26, %c0_i32_10 : i32
    scf.if %27 {
      %28 = tpu.iota {dimensions = array<i32: 0>} : vector<64x128xi32>
      %29 = tpu.iota {dimensions = array<i32: 1>} : vector<64x128xi32>
      %c64_i32 = arith.constant 64 : i32
      %30 = arith.muli %17, %c64_i32 : i32
      %31 = vector.broadcast %30 : i32 to vector<64x128xi32>
      %32 = arith.addi %31, %28 : vector<64x128xi32>
      %c128_i32 = arith.constant 128 : i32
      %33 = vector.broadcast %c128_i32 : i32 to vector<64x128xi32>
      %34 = arith.muli %32, %33 : vector<64x128xi32>
      %35 = arith.addi %34, %29 : vector<64x128xi32>
      %c300_i32_11 = arith.constant 300 : i32
      %36 = vector.broadcast %c300_i32_11 : i32 to vector<64x128xi32>
      %37 = arith.cmpi slt, %35, %36 : vector<64x128xi32>
      %cst_12 = arith.constant 0.000000e+00 : f32
      %38 = vector.broadcast %cst_12 : f32 to vector<64x128xf32>
      %39 = arith.select %37, %15, %38 : vector<64x128xi1>, vector<64x128xf32>
      %c0_13 = arith.constant 0 : index
      %c0_14 = arith.constant 0 : index
      %40 = vector.load %arg4[%c0_13, %c0_14] : memref<64x128xf32, #tpu.memory_space<vmem>>, vector<64x128xf32>
      %41 = vector.shape_cast %39 : vector<64x128xf32> to vector<1x64x128xf32>
      %cst_15 = arith.constant dense<0.000000e+00> : vector<64x128xf32>
      %42 = vector.multi_reduction <add>, %41, %cst_15 [0] : vector<1x64x128xf32> to vector<64x128xf32>
      %43 = arith.addf %40, %42 : vector<64x128xf32>
      %c0_16 = arith.constant 0 : index
      %c0_17 = arith.constant 0 : index
      %44 = vector.load %arg4[%c0_16, %c0_17] : memref<64x128xf32, #tpu.memory_space<vmem>>, vector<64x128xf32>
      tpu.vector_store %arg4[%c0_16, %c0_17], %43 {strides = array<i32>} : memref<64x128xf32, #tpu.memory_space<vmem>>, vector<64x128xf32>,
    } else {
    }
    return
  }
  func.func @transform_0(%arg0: i32, %arg1: i32) -> (i32, i32) {
    %c1_i32 = arith.constant 1 : i32
    %0 = arith.muli %arg0, %c1_i32 : i32
    %1 = arith.addi %0, %arg1 : i32
    %c0_i32 = arith.constant 0 : i32
    %2 = arith.minsi %1, %c0_i32 : i32
    %c0_i32_0 = arith.constant 0 : i32
    %c0_i32_1 = arith.constant 0 : i32
    return %2, %c0_i32_0 : i32, i32
  }
  func.func @transform_1(%arg0: i32, %arg1: i32) -> (i32, i32) {
    %c1_i32 = arith.constant 1 : i32
    %0 = arith.muli %arg0, %c1_i32 : i32
    %1 = arith.addi %0, %arg1 : i32
    %c0_i32 = arith.constant 0 : i32
    %2 = arith.minsi %1, %c0_i32 : i32
    %c0_i32_0 = arith.constant 0 : i32
    %c0_i32_1 = arith.constant 0 : i32
    return %2, %c0_i32_0 : i32, i32
  }
  func.func @transform_2(%arg0: i32, %arg1: i32) -> (i32, i32) {
    %c0_i32 = arith.constant 0 : i32
    %c0_i32_0 = arith.constant 0 : i32
    return %arg0, %c0_i32 : i32, i32
  }
}

</mosaic_0001>

<llo_original>
// kernel: tpu_custom_call.1
$region0: #{tpu_custom_call.1}
  #allocation0 [shape = 'u32[]', space=smem, size = 0x4, offset = 0x4, fixed_abs, tag = 'smem constant byte address 0x4 - core index']
  #allocation1 [shape = 'u32[144,128]{1,0:T(1,128)}', space=vmem, size = 0x12000, scoped, tag = 'internal scratch']
  %s0 = inlined_call_operand.hbm [shape: f32[3,128], index: 0, kind: input, shape index: {}]
  %s1 = inlined_call_operand.vmem [shape: s8[3,128], index: 1, kind: input, shape index: {}]
  %s2 = inlined_call_operand.hbm [shape: f32[128,128], index: 2, kind: output, shape index: {}]
  %s3 = sld [smem:[#allocation0]]
  $region57: #{tpu_custom_call.1} parent=0
    _
  %s5 = ssub.s32 1, %s3
  %s6 = scalar_select 0, %s5, %s3
  $region1: #{tpu_custom_call.1} parent=0
    #allocation2 [shape = 'u8[65536]{0}', space=vmem, size = 0x10000, scoped, tag = 'input window, operand 0']
    #allocation3 [shape = 's32[2]{0}', space=sflag, size = 0x8, scoped, tag = 'scoped memory for tpu_custom_call.1']
    #allocation4 [shape = 's32[2]{0}', space=sflag, size = 0x8, scoped, tag = 'scoped memory for tpu_custom_call.1']
    #allocation5 [shape = 'u8[65536]{0}', space=vmem, size = 0x10000, scoped, tag = 'output window, operand 0']
    %7 = vsyncpa [#allocation3], 0
    %s8 = scalar_lea.sflag [#allocation3], 1
    %9 = vsyncpa %s8, 0
    %10 = vsyncpa [#allocation4], 0
    %s11 = scalar_lea.sflag [#allocation4], 1
    %12 = vsyncpa %s11, 0
    loop: start=0, step=1, limit=4
    $region2: #{tpu_custom_call.1} parent=1 // loop_pre_header
      _
    $region3: #{tpu_custom_call.1} parent=1 // loop_header
      %s14 = sphi 0, %s18
      %p15 = scmp.ge.s32.totalorder %s14, 4
      %s21 = sphi 0, %s33
      %s22 = sphi 0, %s29
      %s23 = sphi 0, %s21
      %s24 = sphi 0, %s22
      %s25 = sphi 0, %s23
      %s26 = sphi 0, %s24
      %s42 = sphi 0, %s44
      %s45 = sphi 0, %s42
      %s46 = sphi 0, %s45
      %s62 = sphi 0, %s46
      %s74 = sphi 0, %s76
      %s77 = sphi 0, %s74
      %s78 = sphi 0, %s77
      %s94 = sphi 0, %s78
      %s100 = sphi 0, %s102
      %s103 = sphi 0, %s100
      %s104 = sphi 0, %s103
      %s120 = sphi 0, %s104
    $region4: #{tpu_custom_call.1} parent=1 // loop_header_branch
      %17 = sbr.rel (%p15) target = $region8
    $region5: #{tpu_custom_call.1} parent=1 // loop_body
      %s19 = ssub.s32 %s14, 1
      %s20 = ssub.s32 %s14, 2
      %s27 = sadd.s32 1, %s22
      %p28 = scmp.ge.s32.totalorder %s27, 1
      %s29 = scalar_select %p28, 0, %s27
      %s30 = sadd.s32 1, %s21
      %s31 = scalar_select %p28, %s30, %s21
      %p32 = scmp.ge.s32.totalorder %s31, 2
      %s33 = scalar_select %p32, 0, %s31
      %s34 = sadd.s32 %s21, %s22
      %p35 = scmp.lt.s32.totalorder %s34, 0
      %s36 = scalar_select %p35, %s34, 0
      %s37 = sadd.s32 %s33, %s29
      %p38 = scmp.lt.s32.totalorder %s37, 0
      %s39 = scalar_select %p38, %s37, 0
      %s40 = ssub.s32 %s36, %s39
      %p41 = scmp.eq.s32.totalorder %s40, 0
      %s43 = sadd.s32 %s42, 1
      %s44 = scalar_select %p41, %s42, %s43
      %p47 = pneg %p41
      %p48 = scmp.eq.s32.totalorder %s14, 1
      %p49 = por %p47, %p48
      %p50 = scmp.ne.s32.totalorder %s42, %s45
      %p51 = scmp.eq.s32.totalorder %s14, 0
      %p52 = por %p50, %p51
      %p53 = scmp.ne.s32.totalorder %s42, %s45
      %p54 = scmp.eq.s32.totalorder %s19, 1
      %p55 = por %p53, %p54
      %p56 = scmp.ne.s32.totalorder %s45, %s46
      %p57 = scmp.eq.s32.totalorder %s19, 0
      %p58 = por %p56, %p57
      %p59 = scmp.ne.s32.totalorder %s45, %s46
      %p60 = scmp.eq.s32.totalorder %s20, 1
      %p61 = por %p59, %p60
      %p63 = scmp.ne.s32.totalorder %s46, %s62
      %p64 = scmp.eq.s32.totalorder %s20, 0
      %p65 = por %p63, %p64
      %s66 = sadd.s32 %s21, %s22
      %p67 = scmp.lt.s32.totalorder %s66, 0
      %s68 = scalar_select %p67, %s66, 0
      %s69 = sadd.s32 %s33, %s29
      %p70 = scmp.lt.s32.totalorder %s69, 0
      %s71 = scalar_select %p70, %s69, 0
      %s72 = ssub.s32 %s68, %s71
      %p73 = scmp.eq.s32.totalorder %s72, 0
      %s75 = sadd.s32 %s74, 1
      %s76 = scalar_select %p73, %s74, %s75
      %p79 = pneg %p73
      %p80 = scmp.eq.s32.totalorder %s14, 1
      %p81 = por %p79, %p80
      %p82 = scmp.ne.s32.totalorder %s74, %s77
      %p83 = scmp.eq.s32.totalorder %s14, 0
      %p84 = por %p82, %p83
      %p85 = scmp.ne.s32.totalorder %s74, %s77
      %p86 = scmp.eq.s32.totalorder %s19, 1
      %p87 = por %p85, %p86
      %p88 = scmp.ne.s32.totalorder %s77, %s78
      %p89 = scmp.eq.s32.totalorder %s19, 0
      %p90 = por %p88, %p89
      %p91 = scmp.ne.s32.totalorder %s77, %s78
      %p92 = scmp.eq.s32.totalorder %s20, 1
      %p93 = por %p91, %p92
      %p95 = scmp.ne.s32.totalorder %s78, %s94
      %p96 = scmp.eq.s32.totalorder %s20, 0
      %p97 = por %p95, %p96
      %s98 = ssub.s32 %s21, %s33
      %p99 = scmp.eq.s32.totalorder %s98, 0
      %s101 = sadd.s32 %s100, 1
      %s102 = scalar_select %p99, %s100, %s101
      %p105 = pneg %p99
      %p106 = scmp.eq.s32.totalorder %s14, 1
      %p107 = por %p105, %p106
      %p108 = scmp.ne.s32.totalorder %s100, %s103
      %p109 = scmp.eq.s32.totalorder %s14, 0
      %p110 = por %p108, %p109
      %p111 = scmp.ne.s32.totalorder %s100, %s103
      %p112 = scmp.eq.s32.totalorder %s19, 1
      %p113 = por %p111, %p112
      %p114 = scmp.ne.s32.totalorder %s103, %s104
      %p115 = scmp.eq.s32.totalorder %s19, 0
      %p116 = por %p114, %p115
      %p117 = scmp.ne.s32.totalorder %s103, %s104
      %p118 = scmp.eq.s32.totalorder %s20, 1
      %p119 = por %p117, %p118
      %p121 = scmp.ne.s32.totalorder %s104, %s120
      %p122 = scmp.eq.s32.totalorder %s20, 0
      %p123 = por %p121, %p122
      %p124 = scmp.le.s32.totalorder 1, %s14
      %p125 = scmp.lt.s32.totalorder %s14, 3
      %p126 = pnand %p124, %p125
      %p127 = pneg %p126
      // Predicated region
      $region9: #{tpu_custom_call.1} parent=5 // pred_check
        _
      $region10: #{tpu_custom_call.1} parent=5 // pred_check_branch
        %129 = sbr.rel (%p126) target = $region12
      $region11: #{tpu_custom_call.1} parent=5 // pred_region
        %s130 = ssub.s32 %s14, 1
      $region12: #{tpu_custom_call.1} parent=5 // pred_fallthru
        _
      %p131 = scmp.lt.s32.totalorder %s14, 2
      // Predicated region
      $region13: #{tpu_custom_call.1} parent=5 // pred_check
        %p132 = pneg %p131
      $region14: #{tpu_custom_call.1} parent=5 // pred_check_branch
        %134 = sbr.rel (%p132) target = $region16
      $region15: #{tpu_custom_call.1} parent=5 // pred_region
        // Predicated region
        $region17: #{tpu_custom_call.1} parent=15 // pred_check
          %p135 = pneg %p52
        $region18: #{tpu_custom_call.1} parent=15 // pred_check_branch
          %137 = sbr.rel (%p135) target = $region20
        $region19: #{tpu_custom_call.1} parent=15 // pred_region
          %s138 = sand.u32 %s42, 1
          %s139 = scalar_lea.sflag [#allocation3], %s138
          %s140 = sand.u32 %s42, 1
          %s141 = smul.addr %s140, 64
          %s142 = scalar_lea.vmem [#allocation2], %s141
          %s143 = sadd.s32 %s21, %s22
          %p144 = scmp.lt.s32.totalorder %s143, 0
          %s145 = scalar_select %p144, %s143, 0
          %s146 = smul.u32 16, %s145
          %s147 = ssub.s32 1, %s146
          %s148 = smul.u32 64, %s147
          %s150 = ssub.s32 1024, %s148
          %151 = vsyncadd %s139, %s150
          %p152 = scmp.ne.s32.totalorder 0, %s148
          %s153 = smul.addr %s146, 64
          %s154 = scalar_lea.hbm %s0, %s153
          %s155 = smul.u32 4, %s147
          %s156 = sshll.u32 %s142, 4
          %s157 = int_to_ptr.vmem [resolvable:$true] %s156
          %s158 = sshll.u32 %s155, 4
          %162 = dma.hbm_to_vmem [thread:$0]  (%p152), %s154, %s158, %s157, %s139, 64, 64, 4
        $region20: #{tpu_custom_call.1} parent=15 // pred_fallthru
          _
        // Predicated region
        $region21: #{tpu_custom_call.1} parent=15 // pred_check
          %p163 = pneg %p84
        $region22: #{tpu_custom_call.1} parent=15 // pred_check_branch
          %165 = sbr.rel (%p163) target = $region24
        $region23: #{tpu_custom_call.1} parent=15 // pred_region
          %s166 = sadd.s32 %s21, %s22
          %p167 = scmp.lt.s32.totalorder %s166, 0
          %s168 = scalar_select %p167, %s166, 0
          %s169 = smul.u32 16, %s168
          %s170 = ssub.s32 1, %s169
          %s171 = smul.u32 16, %s170
          %p172 = scmp.lt.s32.totalorder %s169, 0
          %s173 = scalar_select %p172, %s169, 0
          %s174 = scalar_lea.vmem %s1, %s173
          %s175 = sadd.s32 %s21, %s22
          %p176 = scmp.lt.s32.totalorder %s175, 0
          %s177 = scalar_select %p176, %s175, 0
          %s178 = smul.u32 16, %s177
          %s179 = ssub.s32 1, %s178
          %s180 = smul.u32 16, %s179
        $region24: #{tpu_custom_call.1} parent=15 // pred_fallthru
          _
      $region16: #{tpu_custom_call.1} parent=5 // pred_fallthru
        _
      %p181 = scmp.le.s32.totalorder 1, %s14
      %p182 = scmp.lt.s32.totalorder %s14, 3
      %p183 = pnand %p181, %p182
      %p184 = pneg %p183
      // Predicated region
      $region25: #{tpu_custom_call.1} parent=5 // pred_check
        _
      $region26: #{tpu_custom_call.1} parent=5 // pred_check_branch
        %186 = sbr.rel (%p183) target = $region28
      $region27: #{tpu_custom_call.1} parent=5 // pred_region
        %s187 = ssub.s32 %s14, 1
        %s188 = sand.u32 %s45, 1
        %s189 = scalar_lea.sflag [#allocation3], %s188
        %s190 = sand.u32 %s45, 1
        %s191 = smul.addr %s190, 64
        %s192 = scalar_lea.vmem [#allocation2], %s191
        // Predicated region
        $region29: #{tpu_custom_call.1} parent=27 // pred_check
          %p193 = pneg %p58
        $region30: #{tpu_custom_call.1} parent=27 // pred_check_branch
          %195 = sbr.rel (%p193) target = $region32
        $region31: #{tpu_custom_call.1} parent=27 // pred_region
          %196 = dma.done %s189, 1024
        $region32: #{tpu_custom_call.1} parent=27 // pred_fallthru
          _
        %s197 = sand.u32 %s45, 1
        %s198 = scalar_lea.sflag [#allocation3], %s197
        %s199 = sand.u32 %s45, 1
        %s200 = smul.addr %s199, 64
        %s201 = scalar_lea.vmem [#allocation2], %s200
        %p202 = pneg %p58
        %p203 = pneg %p55
        %s204 = sadd.s32 %s23, %s24
        %p205 = scmp.lt.s32.totalorder %s204, 0
        %s206 = scalar_select %p205, %s204, 0
        %s207 = smul.u32 16, %s206
        %s208 = ssub.s32 1, %s207
        %s209 = smul.u32 16, %s208
        %p210 = scmp.lt.s32.totalorder %s207, 0
        %s211 = scalar_select %p210, %s207, 0
        %s212 = scalar_lea.vmem %s1, %s211
        %p213 = pneg %p90
        %p214 = pneg %p87
        %p215 = pneg %p116
        %p216 = pneg %p113
        %s217 = sand.u32 %s103, 1
        %s218 = scalar_lea.sflag [#allocation4], %s217
        %s219 = sand.u32 %s103, 1
        %s220 = smul.addr %s219, 64
        %s221 = scalar_lea.vmem [#allocation5], %s220
        %s222 = sadd.s32 %s23, %s24
        %p223 = scmp.lt.s32.totalorder %s222, 0
        %s224 = scalar_select %p223, %s222, 0
        %s225 = smul.u32 16, %s224
        %s226 = ssub.s32 1, %s225
        %s227 = smul.u32 64, %s226
        %s228 = sadd.s32 %s23, %s24
        %p229 = scmp.lt.s32.totalorder %s228, 0
        %s230 = scalar_select %p229, %s228, 0
        %s231 = smul.u32 16, %s230
        %s232 = ssub.s32 1, %s231
        %s233 = smul.u32 16, %s232
        %p234 = scmp.lt.s32.totalorder %s231, 0
        %s235 = scalar_select %p234, %s231, 0
        %s236 = scalar_lea.vmem %s1, %s235
        %s237 = sadd.s32 %s23, %s24
        %p238 = scmp.lt.s32.totalorder %s237, 0
        %s239 = scalar_select %p238, %s237, 0
        %s240 = smul.u32 16, %s239
        %s241 = ssub.s32 1, %s240
        %s242 = smul.u32 16, %s241
        %s243 = smul.u32 8, %s23
        %p244 = scmp.eq.s32.totalorder %s24, 0
        // Predicated region
        $region33: #{tpu_custom_call.1} parent=27 // pred_check
          %p245 = pneg %p244
        $region34: #{tpu_custom_call.1} parent=27 // pred_check_branch
          %247 = sbr.rel (%p245) target = $region36
        $region35: #{tpu_custom_call.1} parent=27 // pred_region
          %248 = vst [vmem:[%s221] sm:$0xff] 0.0
          %249 = vst [vmem:[%s221 + $0x8] sm:$0xff] 0.0
          %250 = vst [vmem:[%s221 + $0x10] sm:$0xff] 0.0
          %251 = vst [vmem:[%s221 + $0x18] sm:$0xff] 0.0
          %252 = vst [vmem:[%s221 + $0x20] sm:$0xff] 0.0
          %253 = vst [vmem:[%s221 + $0x28] sm:$0xff] 0.0
          %254 = vst [vmem:[%s221 + $0x30] sm:$0xff] 0.0
          %255 = vst [vmem:[%s221 + $0x38] sm:$0xff] 0.0
        $region36: #{tpu_custom_call.1} parent=27 // pred_fallthru
          _
        %v256 = vld [vmem:[%s192] sm:$0xff]
        %v257 = vld [vmem:[%s192 + $0x8] sm:$0xff]
        %v258 = vld [vmem:[%s192 + $0x10] sm:$0xff]
        %v259 = vld [vmem:[%s192 + $0x18] sm:$0xff]
        %v260 = vld [vmem:[%s192 + $0x20] sm:$0xff]
        %v261 = vld [vmem:[%s192 + $0x28] sm:$0xff]
        %v262 = vld [vmem:[%s192 + $0x30] sm:$0xff]
        %v263 = vld [vmem:[%s192 + $0x38] sm:$0xff]
        %v264 = vld [vmem:[%s236] sm:$0x1]
        %v265 = vld [vmem:[%s236 + $0x1] sm:$0x1]
        %v266 = vld [vmem:[%s236 + $0x2] sm:$0x1]
        %v267 = vld [vmem:[%s236 + $0x3] sm:$0x1]
        %v268 = vld [vmem:[%s236 + $0x4] sm:$0x1]
        %v269 = vld [vmem:[%s236 + $0x5] sm:$0x1]
        %v270 = vld [vmem:[%s236 + $0x6] sm:$0x1]
        %v271 = vld [vmem:[%s236 + $0x7] sm:$0x1]
        %v272 = vld [vmem:[%s236 + $0x8] sm:$0x1]
        %v273 = vld [vmem:[%s236 + $0x9] sm:$0x1]
        %v274 = vld [vmem:[%s236 + $0xa] sm:$0x1]
        %v275 = vld [vmem:[%s236 + $0xb] sm:$0x1]
        %v276 = vld [vmem:[%s236 + $0xc] sm:$0x1]
        %v277 = vld [vmem:[%s236 + $0xd] sm:$0x1]
        %v278 = vld [vmem:[%s236 + $0xe] sm:$0x1]
        %v279 = vld [vmem:[%s236 + $0xf] sm:$0x1]
        %v280 = vunpack.c.0.s8 %v264
        %v281 = vunpack.c.0.s8 %v265
        %v282 = vunpack.c.0.s8 %v266
        %v283 = vunpack.c.0.s8 %v267
        %v284 = vunpack.c.0.s8 %v268
        %v285 = vunpack.c.0.s8 %v269
        %v286 = vunpack.c.0.s8 %v270
        %v287 = vunpack.c.0.s8 %v271
        %v288 = vunpack.c.0.s8 %v272
        %v289 = vunpack.c.0.s8 %v273
        %v290 = vunpack.c.0.s8 %v274
        %v291 = vunpack.c.0.s8 %v275
        %v292 = vunpack.c.0.s8 %v276
        %v293 = vunpack.c.0.s8 %v277
        %v294 = vunpack.c.0.s8 %v278
        %v295 = vunpack.c.0.s8 %v279
        %v296 = vcvt.s32.f32 %v280
        %v297 = vcvt.s32.f32 %v281
        %v298 = vcvt.s32.f32 %v282
        %v299 = vcvt.s32.f32 %v283
        %v300 = vcvt.s32.f32 %v284
        %v301 = vcvt.s32.f32 %v285
        %v302 = vcvt.s32.f32 %v286
        %v303 = vcvt.s32.f32 %v287
        %v304 = vcvt.s32.f32 %v288
        %v305 = vcvt.s32.f32 %v289
        %v306 = vcvt.s32.f32 %v290
        %v307 = vcvt.s32.f32 %v291
        %v308 = vcvt.s32.f32 %v292
        %v309 = vcvt.s32.f32 %v293
        %v310 = vcvt.s32.f32 %v294
        %v311 = vcvt.s32.f32 %v295
        %v312 = vmax.f32 %v256, 0.0
        %v313 = vmax.f32 %v257, 0.0
        %v314 = vmax.f32 %v258, 0.0
        %v315 = vmax.f32 %v259, 0.0
        %v316 = vmax.f32 %v260, 0.0
        %v317 = vmax.f32 %v261, 0.0
        %v318 = vmax.f32 %v262, 0.0
        %v319 = vmax.f32 %v263, 0.0
        %v336 = vcombine.low %v296, %v297
        %v337 = vcombine.low %v298, %v299
        %v338 = vcombine.low %v300, %v301
        %v339 = vcombine.low %v302, %v303
        %v340 = vcombine.low %v304, %v305
        %v341 = vcombine.low %v306, %v307
        %v342 = vcombine.low %v308, %v309
        %v343 = vcombine.low %v310, %v311
        %v352 = vmul.f32 %v256, %v336
        %v353 = vmul.f32 %v257, %v337
        %v354 = vmul.f32 %v258, %v338
        %v355 = vmul.f32 %v259, %v339
        %v356 = vmul.f32 %v260, %v340
        %v357 = vmul.f32 %v261, %v341
        %v358 = vmul.f32 %v262, %v342
        %v359 = vmul.f32 %v263, %v343
        %v360 = vsub.f32 %v312, %v352
        %v361 = vsub.f32 %v313, %v353
        %v362 = vsub.f32 %v314, %v354
        %v363 = vsub.f32 %v315, %v355
        %v364 = vsub.f32 %v316, %v356
        %v365 = vsub.f32 %v317, %v357
        %v366 = vsub.f32 %v318, %v358
        %v367 = vsub.f32 %v319, %v359
        %v368 = vand.u32 2147483647, %v256
        %v369 = vand.u32 2147483647, %v257
        %v370 = vand.u32 2147483647, %v258
        %v371 = vand.u32 2147483647, %v259
        %v372 = vand.u32 2147483647, %v260
        %v373 = vand.u32 2147483647, %v261
        %v374 = vand.u32 2147483647, %v262
        %v375 = vand.u32 2147483647, %v263
        %v376 = vsub.f32 0.0, %v368
        %v377 = vsub.f32 0.0, %v369
        %v378 = vsub.f32 0.0, %v370
        %v379 = vsub.f32 0.0, %v371
        %v380 = vsub.f32 0.0, %v372
        %v381 = vsub.f32 0.0, %v373
        %v382 = vsub.f32 0.0, %v374
        %v383 = vsub.f32 0.0, %v375
        %v384 = vmul.f32 %v376, 1.442695
        %v385 = vpow.pop %v384
        %v386 = vmul.f32 %v377, 1.442695
        %v387 = vpow.pop %v386
        %v388 = vmul.f32 %v378, 1.442695
        %v389 = vpow.pop %v388
        %v390 = vmul.f32 %v379, 1.442695
        %v391 = vpow.pop %v390
        %v392 = vmul.f32 %v380, 1.442695
        %v393 = vpow.pop %v392
        %v394 = vmul.f32 %v381, 1.442695
        %v395 = vpow.pop %v394
        %v396 = vmul.f32 %v382, 1.442695
        %v397 = vpow.pop %v396
        %v398 = vmul.f32 %v383, 1.442695
        %v399 = vpow.pop %v398
        %v400 = vadd.f32 %v385, 1.0
        %v401 = vlog2.pop %v400
        %v402 = vmul.f32 %v401, 0.6931472
        %v403 = vmul.f32 -0.5, %v385
        %v404 = vadd.f32 %v403, 1.0
        %v405 = vmul.f32 %v404, %v385
        %v406 = vand.u32 2147483647, %v385
        %vm407 = vcmp.lt.f32.partialorder %v406, 0.0004427343
        %v408 = vsel %vm407, %v405, %v402
        %v409 = vadd.f32 %v387, 1.0
        %v410 = vlog2.pop %v409
        %v411 = vmul.f32 %v410, 0.6931472
        %v412 = vmul.f32 -0.5, %v387
        %v413 = vadd.f32 %v412, 1.0
        %v414 = vmul.f32 %v413, %v387
        %v415 = vand.u32 2147483647, %v387
        %vm416 = vcmp.lt.f32.partialorder %v415, 0.0004427343
        %v417 = vsel %vm416, %v414, %v411
        %v418 = vadd.f32 %v389, 1.0
        %v419 = vlog2.pop %v418
        %v420 = vmul.f32 %v419, 0.6931472
        %v421 = vmul.f32 -0.5, %v389
        %v422 = vadd.f32 %v421, 1.0
        %v423 = vmul.f32 %v422, %v389
        %v424 = vand.u32 2147483647, %v389
        %vm425 = vcmp.lt.f32.partialorder %v424, 0.0004427343
        %v426 = vsel %vm425, %v423, %v420
        %v427 = vadd.f32 %v391, 1.0
        %v428 = vlog2.pop %v427
        %v429 = vmul.f32 %v428, 0.6931472
        %v430 = vmul.f32 -0.5, %v391
        %v431 = vadd.f32 %v430, 1.0
        %v432 = vmul.f32 %v431, %v391
        %v433 = vand.u32 2147483647, %v391
        %vm434 = vcmp.lt.f32.partialorder %v433, 0.0004427343
        %v435 = vsel %vm434, %v432, %v429
        %v436 = vadd.f32 %v393, 1.0
        %v437 = vlog2.pop %v436
        %v438 = vmul.f32 %v437, 0.6931472
        %v439 = vmul.f32 -0.5, %v393
        %v440 = vadd.f32 %v439, 1.0
        %v441 = vmul.f32 %v440, %v393
        %v442 = vand.u32 2147483647, %v393
        %vm443 = vcmp.lt.f32.partialorder %v442, 0.0004427343
        %v444 = vsel %vm443, %v441, %v438
        %v445 = vadd.f32 %v395, 1.0
        %v446 = vlog2.pop %v445
        %v447 = vmul.f32 %v446, 0.6931472
        %v448 = vmul.f32 -0.5, %v395
        %v449 = vadd.f32 %v448, 1.0
        %v450 = vmul.f32 %v449, %v395
        %v451 = vand.u32 2147483647, %v395
        %vm452 = vcmp.lt.f32.partialorder %v451, 0.0004427343
        %v453 = vsel %vm452, %v450, %v447
        %v454 = vadd.f32 %v397, 1.0
        %v455 = vlog2.pop %v454
        %v456 = vmul.f32 %v455, 0.6931472
        %v457 = vmul.f32 -0.5, %v397
        %v458 = vadd.f32 %v457, 1.0
        %v459 = vmul.f32 %v458, %v397
        %v460 = vand.u32 2147483647, %v397
        %vm461 = vcmp.lt.f32.partialorder %v460, 0.0004427343
        %v462 = vsel %vm461, %v459, %v456
        %v463 = vadd.f32 %v399, 1.0
        %v464 = vlog2.pop %v463
        %v465 = vmul.f32 %v464, 0.6931472
        %v466 = vmul.f32 -0.5, %v399
        %v467 = vadd.f32 %v466, 1.0
        %v468 = vmul.f32 %v467, %v399
        %v469 = vand.u32 2147483647, %v399
        %vm470 = vcmp.lt.f32.partialorder %v469, 0.0004427343
        %v471 = vsel %vm470, %v468, %v465
        %v472 = vadd.f32 %v360, %v408
        %v473 = vadd.f32 %v361, %v417
        %v474 = vadd.f32 %v362, %v426
        %v475 = vadd.f32 %v363, %v435
        %v476 = vadd.f32 %v364, %v444
        %v477 = vadd.f32 %v365, %v453
        %v478 = vadd.f32 %v366, %v462
        %v479 = vadd.f32 %v367, %v471
        %s480 = sadd.s32 %s23, %s24
        %s481 = sadd.s32 %s480, 1
        %s482 = smul.u32 %s481, 8192
        %p483 = scmp.le.s32.totalorder %s482, 300
        // Predicated region
        $region37: #{tpu_custom_call.1} parent=27 // pred_check
          %p484 = pneg %p483
        $region38: #{tpu_custom_call.1} parent=27 // pred_check_branch
          %486 = sbr.rel (%p484) target = $region40
        $region39: #{tpu_custom_call.1} parent=27 // pred_region
          %v487 = vld [vmem:[%s221] sm:$0xff]
          %v488 = vld [vmem:[%s221 + $0x8] sm:$0xff]
          %v489 = vld [vmem:[%s221 + $0x10] sm:$0xff]
          %v490 = vld [vmem:[%s221 + $0x18] sm:$0xff]
          %v491 = vld [vmem:[%s221 + $0x20] sm:$0xff]
          %v492 = vld [vmem:[%s221 + $0x28] sm:$0xff]
          %v493 = vld [vmem:[%s221 + $0x30] sm:$0xff]
          %v494 = vld [vmem:[%s221 + $0x38] sm:$0xff]
          %v495 = vadd.f32 %v472, 0.0
          %v496 = vadd.f32 %v473, 0.0
          %v497 = vadd.f32 %v474, 0.0
          %v498 = vadd.f32 %v475, 0.0
          %v499 = vadd.f32 %v476, 0.0
          %v500 = vadd.f32 %v477, 0.0
          %v501 = vadd.f32 %v478, 0.0
          %v502 = vadd.f32 %v479, 0.0
          %v503 = vadd.f32 %v487, %v495
          %v504 = vadd.f32 %v488, %v496
          %v505 = vadd.f32 %v489, %v497
          %v506 = vadd.f32 %v490, %v498
          %v507 = vadd.f32 %v491, %v499
          %v508 = vadd.f32 %v492, %v500
          %v509 = vadd.f32 %v493, %v501
          %v510 = vadd.f32 %v494, %v502
          %511 = vst [vmem:[%s221] sm:$0xff] %v503
          %512 = vst [vmem:[%s221 + $0x8] sm:$0xff] %v504
          %513 = vst [vmem:[%s221 + $0x10] sm:$0xff] %v505
          %514 = vst [vmem:[%s221 + $0x18] sm:$0xff] %v506
          %515 = vst [vmem:[%s221 + $0x20] sm:$0xff] %v507
          %516 = vst [vmem:[%s221 + $0x28] sm:$0xff] %v508
          %517 = vst [vmem:[%s221 + $0x30] sm:$0xff] %v509
          %518 = vst [vmem:[%s221 + $0x38] sm:$0xff] %v510
        $region40: #{tpu_custom_call.1} parent=27 // pred_fallthru
          _
        %p519 = scmp.gt.s32.totalorder %s482, 300
        // Predicated region
        $region41: #{tpu_custom_call.1} parent=27 // pred_check
          %p520 = pneg %p519
        $region42: #{tpu_custom_call.1} parent=27 // pred_check_branch
          %522 = sbr.rel (%p520) target = $region44
        $region43: #{tpu_custom_call.1} parent=27 // pred_region
          %v523 = vlaneseq
          %v524 = vshrl.u32 %v523, 7
          %v525 = vadd.s32 %v524, 8
          %v526 = vadd.s32 %v524, 16
          %v527 = vadd.s32 %v524, 24
          %v528 = vadd.s32 %v524, 32
          %v529 = vadd.s32 %v524, 40
          %v530 = vadd.s32 %v524, 48
          %v531 = vadd.s32 %v524, 56
          %v532 = vlaneseq
          %v533 = vand.u32 %v532, 127
          %s534 = smul.u32 %s480, 64
          %v535 = vstv %s534
          %v536 = vadd.s32 %v535, %v524
          %v537 = vadd.s32 %v535, %v525
          %v538 = vadd.s32 %v535, %v526
          %v539 = vadd.s32 %v535, %v527
          %v540 = vadd.s32 %v535, %v528
          %v541 = vadd.s32 %v535, %v529
          %v542 = vadd.s32 %v535, %v530
          %v543 = vadd.s32 %v535, %v531
          %v544 = vmul.u32 %v536, 128
          %v545 = vmul.u32 %v537, 128
          %v546 = vmul.u32 %v538, 128
          %v547 = vmul.u32 %v539, 128
          %v548 = vmul.u32 %v540, 128
          %v549 = vmul.u32 %v541, 128
          %v550 = vmul.u32 %v542, 128
          %v551 = vmul.u32 %v543, 128
          %v552 = vadd.s32 %v544, %v533
          %v553 = vadd.s32 %v545, %v533
          %v554 = vadd.s32 %v546, %v533
          %v555 = vadd.s32 %v547, %v533
          %v556 = vadd.s32 %v548, %v533
          %v557 = vadd.s32 %v549, %v533
          %v558 = vadd.s32 %v550, %v533
          %v559 = vadd.s32 %v551, %v533
          %vm560 = vcmp.lt.s32.totalorder %v552, 300
          %vm561 = vcmp.lt.s32.totalorder %v553, 300
          %vm562 = vcmp.lt.s32.totalorder %v554, 300
          %vm563 = vcmp.lt.s32.totalorder %v555, 300
          %vm564 = vcmp.lt.s32.totalorder %v556, 300
          %vm565 = vcmp.lt.s32.totalorder %v557, 300
          %vm566 = vcmp.lt.s32.totalorder %v558, 300
          %vm567 = vcmp.lt.s32.totalorder %v559, 300
          %v568 = vsel %vm560, %v472, 0.0
          %v569 = vsel %vm561, %v473, 0.0
          %v570 = vsel %vm562, %v474, 0.0
          %v571 = vsel %vm563, %v475, 0.0
          %v572 = vsel %vm564, %v476, 0.0
          %v573 = vsel %vm565, %v477, 0.0
          %v574 = vsel %vm566, %v478, 0.0
          %v575 = vsel %vm567, %v479, 0.0
          %v576 = vld [vmem:[%s221] sm:$0xff]
          %v577 = vld [vmem:[%s221 + $0x8] sm:$0xff]
          %v578 = vld [vmem:[%s221 + $0x10] sm:$0xff]
          %v579 = vld [vmem:[%s221 + $0x18] sm:$0xff]
          %v580 = vld [vmem:[%s221 + $0x20] sm:$0xff]
          %v581 = vld [vmem:[%s221 + $0x28] sm:$0xff]
          %v582 = vld [vmem:[%s221 + $0x30] sm:$0xff]
          %v583 = vld [vmem:[%s221 + $0x38] sm:$0xff]
          %v584 = vadd.f32 %v568, 0.0
          %v585 = vadd.f32 %v569, 0.0
          %v586 = vadd.f32 %v570, 0.0
          %v587 = vadd.f32 %v571, 0.0
          %v588 = vadd.f32 %v572, 0.0
          %v589 = vadd.f32 %v573, 0.0
          %v590 = vadd.f32 %v574, 0.0
          %v591 = vadd.f32 %v575, 0.0
          %v592 = vadd.f32 %v576, %v584
          %v593 = vadd.f32 %v577, %v585
          %v594 = vadd.f32 %v578, %v586
          %v595 = vadd.f32 %v579, %v587
          %v596 = vadd.f32 %v580, %v588
          %v597 = vadd.f32 %v581, %v589
          %v598 = vadd.f32 %v582, %v590
          %v599 = vadd.f32 %v583, %v591
          %600 = vst [vmem:[%s221] sm:$0xff] %v592
          %601 = vst [vmem:[%s221 + $0x8] sm:$0xff] %v593
          %602 = vst [vmem:[%s221 + $0x10] sm:$0xff] %v594
          %603 = vst [vmem:[%s221 + $0x18] sm:$0xff] %v595
          %604 = vst [vmem:[%s221 + $0x20] sm:$0xff] %v596
          %605 = vst [vmem:[%s221 + $0x28] sm:$0xff] %v597
          %606 = vst [vmem:[%s221 + $0x30] sm:$0xff] %v598
          %607 = vst [vmem:[%s221 + $0x38] sm:$0xff] %v599
        $region44: #{tpu_custom_call.1} parent=27 // pred_fallthru
          _
        %s608 = sand.u32 %s103, 1
        %s609 = scalar_lea.sflag [#allocation4], %s608
        %s610 = sand.u32 %s103, 1
        %s611 = smul.addr %s610, 64
        %s612 = scalar_lea.vmem [#allocation5], %s611
        // Predicated region
        $region45: #{tpu_custom_call.1} parent=27 // pred_check
          %p613 = pneg %p113
        $region46: #{tpu_custom_call.1} parent=27 // pred_check_branch
          %615 = sbr.rel (%p613) target = $region48
        $region47: #{tpu_custom_call.1} parent=27 // pred_region
          %s616 = smul.u32 8, %s23
          %s618 = ssub.s32 1024, 1024
          %619 = vsyncadd %s609, %s618
          %s620 = smul.addr %s616, 128
          %s621 = scalar_lea.hbm %s2, %s620
          %s622 = sshll.u32 %s612, 4
          %s623 = int_to_ptr.vmem [resolvable:$true] %s622
          %628 = dma.vmem_to_hbm [thread:$0]  %s623, 1024, %s621, %s609, 128, 128, 8
        $region48: #{tpu_custom_call.1} parent=27 // pred_fallthru
          _
      $region28: #{tpu_custom_call.1} parent=5 // pred_fallthru
        _
      %p629 = scmp.le.s32.totalorder 2, %s14
      // Predicated region
      $region49: #{tpu_custom_call.1} parent=5 // pred_check
        %p630 = pneg %p629
      $region50: #{tpu_custom_call.1} parent=5 // pred_check_branch
        %632 = sbr.rel (%p630) target = $region52
      $region51: #{tpu_custom_call.1} parent=5 // pred_region
        %s633 = ssub.s32 %s14, 2
        // Predicated region
        $region53: #{tpu_custom_call.1} parent=51 // pred_check
          %p634 = pneg %p119
        $region54: #{tpu_custom_call.1} parent=51 // pred_check_branch
          %636 = sbr.rel (%p634) target = $region56
        $region55: #{tpu_custom_call.1} parent=51 // pred_region
          %s637 = sand.u32 %s104, 1
          %s638 = scalar_lea.sflag [#allocation4], %s637
          %s639 = sand.u32 %s104, 1
          %s640 = smul.addr %s639, 64
          %s641 = scalar_lea.vmem [#allocation5], %s640
          %642 = dma.done %s638, 1024
        $region56: #{tpu_custom_call.1} parent=51 // pred_fallthru
          _
      $region52: #{tpu_custom_call.1} parent=5 // pred_fallthru
        _
    $region6: #{tpu_custom_call.1} parent=1 // loop_footer
      %s18 = sadd.s32 1, %s14
    $region7: #{tpu_custom_call.1} parent=1 // loop_footer_branch
      %13 = sbr.rel target = $region3
    $region8: #{tpu_custom_call.1} parent=1 // loop_exit
      _
    %643 = vsyncpa [#allocation3], 1
    %s644 = scalar_lea.sflag [#allocation3], 1
    %645 = vsyncpa %s644, 1
    %646 = vsyncpa [#allocation4], 1
    %s647 = scalar_lea.sflag [#allocation4], 1
    %648 = vsyncpa %s647, 1

</llo_original>
